<compile_context>
chip_gen: v7x
topology: tpu7x:2x2x1
jax: 0.10.0
libtpu: 0.0.40
codegen_flags: <defaults>
</compile_context>

<pallas_src>
import jax
import jax.numpy as jnp
from jax.experimental import pallas as pl
from jax.experimental.pallas import tpu as pltpu

_LANE = 128


def _make_channel_attention_kernel(C, TB, hw_true, tile, n_tiles, lane=_LANE):
    n_chunks = tile // lane
    hw_alloc = n_tiles * tile
    needs_mask = hw_alloc != hw_true
    # Number of valid (non-padded) elements inside the LAST spatial tile.
    valid_last = hw_true - (n_tiles - 1) * tile
    # Chunks [0, n_clean) never contain padded elements on any tile; chunks
    # [n_clean, n_chunks) may overlap the zero-padded tail on the last tile.
    n_clean = n_chunks if not needs_mask else (valid_last // lane)
    inv_hw = 1.0 / float(hw_true)
    use_fori = n_clean > 8

    def kernel(x_ref, w1_ref, b1_ref, w2_ref, b2_ref, o_ref, sum_acc, max_acc):
        s = pl.program_id(1)

        @pl.when(s == 0)
        def _init():
            sum_acc[...] = jnp.zeros_like(sum_acc)
            max_acc[...] = jnp.full_like(max_acc, -jnp.inf)

        acc_s = sum_acc[...]          # (TB, C, 128) f32 running-sum partials
        acc_m = max_acc[...]          # (TB, C, 128) f32 running-max partials

        # ---- Clean chunks: no masking at all (2 VALU ops per vreg).
        # Per-chunk ref slices keep live state to a handful of vregs.
        if use_fori:
            def body(k, carry):
                a_s, a_m = carry
                off = pl.multiple_of(k * lane, lane)
                chunk = x_ref[:, :, pl.ds(off, lane)].astype(jnp.float32)
                return a_s + chunk, jnp.maximum(a_m, chunk)

            acc_s, acc_m = jax.lax.fori_loop(
                0, n_clean, body, (acc_s, acc_m), unroll=8)
        else:
            for k in range(n_clean):
                chunk = x_ref[:, :, k * lane:(k + 1) * lane].astype(jnp.float32)
                acc_s = acc_s + chunk
                acc_m = jnp.maximum(acc_m, chunk)

        # ---- Tail chunks: only these can overlap the zero-padded tail.
        # The sum needs no mask (padding is exactly zero); the max gets a
        # global-position -inf mask which is all-true on non-last tiles.
        if n_clean < n_chunks:
            lane_iota = jax.lax.broadcasted_iota(jnp.int32, (1, 1, lane), 2)
            tile_base = s * tile
            for k in range(n_clean, n_chunks):
                chunk = x_ref[:, :, k * lane:(k + 1) * lane].astype(jnp.float32)
                valid = (tile_base + k * lane + lane_iota) < hw_true
                acc_s = acc_s + chunk
                acc_m = jnp.maximum(acc_m, jnp.where(valid, chunk, -jnp.inf))

        sum_acc[...] = acc_s
        max_acc[...] = acc_m

        @pl.when(s == pl.num_programs(1) - 1)
        def _finalize():
            w1 = w1_ref[...]          # (hidden, C)  -- PyTorch fc[0].weight layout
            b1 = b1_ref[...]          # (hidden, 1)
            w2 = w2_ref[...]          # (C, hidden)  -- PyTorch fc[2].weight layout
            b2 = b2_ref[...]          # (C, 1)
            # TB is small and static; this runs once per batch block and is
            # negligible next to the streaming phase.
            for t in range(TB):
                avg_col = jnp.sum(sum_acc[t], axis=-1, keepdims=True) * inv_hw  # (C,1)
                max_col = jnp.max(max_acc[t], axis=-1, keepdims=True)           # (C,1)
                pooled = jnp.concatenate([avg_col, max_col], axis=-1)           # (C,2)
                h = jnp.dot(w1, pooled, preferred_element_type=jnp.float32) + b1  # (hidden,2)
                h = jnp.maximum(h, 0.0)                                          # ReLU
                y = jnp.dot(w2, h, preferred_element_type=jnp.float32) + b2       # (C,2)
                y = jax.nn.sigmoid(y)
                o_ref[t] = (y[:, 0:1] + y[:, 1:2]).astype(o_ref.dtype)           # (C,1)

    return kernel


def channel_attention(x, w1, b1, w2, b2, *, tile_hw=8192,
                      vmem_limit_bytes=32 * 1024 * 1024):
    """ChannelAttention forward.

    x:  (B, C, H, W)   float32 or bfloat16 (accumulation is always f32)
    w1: (hidden, C)    PyTorch nn.Linear(in_channels, hidden).weight (fc[0])
    b1: (hidden,)
    w2: (C, hidden)    PyTorch nn.Linear(hidden, in_channels).weight (fc[2])
    b2: (C,)
    returns (B, C) f32 = sigmoid(mlp(avgpool(x))) + sigmoid(mlp(maxpool(x)))
    """
    B, C, H, W = x.shape
    HW = H * W
    hidden = w1.shape[0]
    assert w1.shape == (hidden, C) and w2.shape == (C, hidden)
    assert b1.shape == (hidden,) and b2.shape == (C,)

    itemsize = jnp.dtype(x.dtype).itemsize
    hw_pad_lane = -(-HW // _LANE) * _LANE

    # Activation slabs are double-buffered by the pipeline; keep each buffer
    # within ~1/4 of the VMEM limit (leaves headroom for weights, scratch and
    # the output, and keeps the same policy safe on v7x's 64 MiB VMEM).
    per_buf_budget = vmem_limit_bytes // 4
    max_tile_vmem = max(_LANE, (per_buf_budget // max(1, C * itemsize)) // _LANE * _LANE)

    tile = min(int(tile_hw), hw_pad_lane, max_tile_vmem)
    tile = max(_LANE, (tile // _LANE) * _LANE)

    n_tiles = -(-hw_pad_lane // tile)
    hw_alloc = n_tiles * tile

    # Fold several batch images into one grid step when HW alone gives small
    # slabs: bigger DMAs per step, fewer grid steps. Keep TB*C small enough
    # that the register-carried accumulators stay cheap.
    target_step_bytes = 2 << 20
    max_tb_regs = max(1, 128 // max(1, C))
    tb = 1
    for cand in range(1, B + 1):
        if B % cand:
            continue
        if cand > max_tb_regs:
            break
        if cand * C * tile * itemsize > per_buf_budget:
            break
        tb = cand
        if cand * C * tile * itemsize >= target_step_bytes:
            break

    x3 = x.reshape(B, C, HW)
    if hw_alloc != HW:
        # Zero padding: sums are unaffected; the kernel -inf-masks the max tail.
        x3 = jnp.pad(x3, ((0, 0), (0, 0), (0, hw_alloc - HW)))

    b1_col = b1.reshape(hidden, 1)
    b2_col = b2.reshape(C, 1)

    kernel = _make_channel_attention_kernel(C, tb, HW, tile, n_tiles)

    cost = pl.CostEstimate(
        flops=2 * B * C * HW + 8 * B * C * hidden,
        transcendentals=2 * B * C,
        bytes_accessed=B * C * hw_alloc * itemsize
        + 4 * (w1.size + b1.size + w2.size + b2.size)
        + 4 * B * C,
    )

    grid_spec = pltpu.PrefetchScalarGridSpec(
        num_scalar_prefetch=0,
        grid=(B // tb, n_tiles),
        in_specs=[
            # Streamed activation slab (double-buffered by the Pallas pipeline).
            pl.BlockSpec((tb, C, tile), lambda b, s: (b, 0, s)),
            # Weights/biases: constant block index -> fetched once, VMEM-resident.
            pl.BlockSpec((hidden, C), lambda b, s: (0, 0)),
            pl.BlockSpec((hidden, 1), lambda b, s: (0, 0)),
            pl.BlockSpec((C, hidden), lambda b, s: (0, 0)),
            pl.BlockSpec((C, 1), lambda b, s: (0, 0)),
        ],
        out_specs=pl.BlockSpec((tb, C, 1), lambda b, s: (b, 0, 0)),
        scratch_shapes=[
            pltpu.VMEM((tb, C, _LANE), jnp.float32),   # running-sum partials
            pltpu.VMEM((tb, C, _LANE), jnp.float32),   # running-max partials
        ],
    )

    out = pl.pallas_call(
        kernel,
        out_shape=jax.ShapeDtypeStruct((B, C, 1), jnp.float32),
        grid_spec=grid_spec,
        compiler_params=pltpu.CompilerParams(
            # Batch blocks are independent; the spatial axis is a reduction.
            dimension_semantics=("parallel", "arbitrary"),
            vmem_limit_bytes=vmem_limit_bytes,
        ),
        cost_estimate=cost,
    )(x3, w1, b1_col, w2, b2_col)

    return out.reshape(B, C)


def reference_channel_attention(x, w1, b1, w2, b2):
    B, C = x.shape[0], x.shape[1]
    xf = x.reshape(B, C, -1).astype(jnp.float32)
    avg = jnp.mean(xf, axis=-1)
    mx = jnp.max(xf, axis=-1)

    def mlp(v):                                   # v: (B, C)
        h = jnp.maximum(v @ w1.T + b1, 0.0)
        return jax.nn.sigmoid(h @ w2.T + b2)

    return mlp(avg) + mlp(mx)


if __name__ == "__main__":
    # Shapes consistent with the module: in_channels=32, reduction_ratio=16.
    B, C = 2, 32
    reduction_ratio = 16
    hidden = C // reduction_ratio  # = 2

    key = jax.random.PRNGKey(0)
    kx1, kx2, kx3, kw1, kb1, kw2, kb2 = jax.random.split(key, 7)

    # Native PyTorch nn.Linear weight layouts: fc[0].weight is (hidden, C),
    # fc[2].weight is (C, hidden); the kernel uses them untransposed.
    w1 = jax.random.normal(kw1, (hidden, C), dtype=jnp.float32) * 0.1
    b1 = jax.random.normal(kb1, (hidden,), dtype=jnp.float32) * 0.1
    w2 = jax.random.normal(kw2, (C, hidden), dtype=jnp.float32) * 0.1
    b2 = jax.random.normal(kb2, (C,), dtype=jnp.float32) * 0.1

    def check(x, name, atol=1e-5, rtol=1e-5, **kw):
        out = jax.block_until_ready(channel_attention(x, w1, b1, w2, b2, **kw))
        ref = reference_channel_attention(x, w1, b1, w2, b2)
        assert out.shape == ref.shape == (B, C)
        assert jnp.allclose(out, ref, atol=atol, rtol=rtol), f"mismatch: {name}"

    # 1) HW fits one tile, no masking (static chunk-loop path).
    x1 = jax.random.normal(kx1, (B, C, 16, 16), dtype=jnp.float32)
    check(x1, "16x16")

    # 2) Ragged HW (169 -> padded to 256): masked max tail, static path.
    x2 = jax.random.normal(kx2, (B, C, 13, 13), dtype=jnp.float32)
    check(x2, "13x13 ragged")

    # 3) Larger ragged HW (2025 -> 2048): fori_loop clean chunks + masked tail.
    x3 = jax.random.normal(kx3, (B, C, 45, 45), dtype=jnp.float32)
    check(x3, "45x45 ragged (fori path)")

    # 4) Same data forced through multiple spatial tiles: exercises the
    #    streaming accumulator across grid steps.
    check(x3, "45x45 multi-tile", tile_hw=512)

    # 5) bfloat16 activations (HBM-bound kernel: half the bytes), f32 accumulate.
    check(x3.astype(jnp.bfloat16), "45x45 bf16", atol=1e-4, rtol=1e-4)

    print("KERNEL_OK")
</pallas_src>

<mosaic_0001>
module attributes {stable_mosaic.version = 11 : i64} {
  func.func @kernel(%arg0: i32, %arg1: i32, %arg2: memref<2x32x256xf32, #tpu.memory_space<vmem>>, %arg3: memref<2x32xf32, #tpu.memory_space<vmem>>, %arg4: memref<2x1xf32, #tpu.memory_space<vmem>>, %arg5: memref<32x2xf32, #tpu.memory_space<vmem>>, %arg6: memref<32x1xf32, #tpu.memory_space<vmem>>, %arg7: memref<2x32x1xf32, #tpu.memory_space<vmem>>, %arg8: memref<2x32x128xf32, #tpu.memory_space<vmem>>, %arg9: memref<2x32x128xf32, #tpu.memory_space<vmem>>) attributes {dimension_semantics = [#tpu.dimension_semantics<parallel>, #tpu.dimension_semantics<arbitrary>], iteration_bounds = array<i64: 1, 1>, scalar_prefetch = 0 : i64, scratch_operands = 2 : i64, tpu.core_type = #tpu.core_type<tc>, window_params = [{transform_indices = @transform_0, window_bounds = array<i64: 2, 32, 256>}, {pipeline_mode = #tpu.pipeline_mode<synchronous>, transform_indices = @transform_1, window_bounds = array<i64: 2, 32>}, {pipeline_mode = #tpu.pipeline_mode<synchronous>, transform_indices = @transform_2, window_bounds = array<i64: 2, 1>}, {pipeline_mode = #tpu.pipeline_mode<synchronous>, transform_indices = @transform_3, window_bounds = array<i64: 32, 2>}, {pipeline_mode = #tpu.pipeline_mode<synchronous>, transform_indices = @transform_4, window_bounds = array<i64: 32, 1>}, {transform_indices = @transform_5, window_bounds = array<i64: 2, 32, 1>}]} {
    %c0_i32 = arith.constant 0 : i32
    %0 = arith.cmpi eq, %arg1, %c0_i32 : i32
    %1 = arith.extui %0 : i1 to i32
    %c0_i32_0 = arith.constant 0 : i32
    %2 = arith.cmpi ne, %1, %c0_i32_0 : i32
    scf.if %2 {
      %cst = arith.constant 0.000000e+00 : f32
      %16 = vector.broadcast %cst : f32 to vector<2x32x128xf32>
      %c0_19 = arith.constant 0 : index
      %c0_20 = arith.constant 0 : index
      %c0_21 = arith.constant 0 : index
      %17 = vector.load %arg8[%c0_19, %c0_20, %c0_21] : memref<2x32x128xf32, #tpu.memory_space<vmem>>, vector<2x32x128xf32>
      tpu.vector_store %arg8[%c0_19, %c0_20, %c0_21], %16 {strides = array<i32>} : memref<2x32x128xf32, #tpu.memory_space<vmem>>, vector<2x32x128xf32>,
      %cst_22 = arith.constant 0xFF800000 : f32
      %18 = vector.broadcast %cst_22 : f32 to vector<2x32x128xf32>
      %c0_23 = arith.constant 0 : index
      %c0_24 = arith.constant 0 : index
      %c0_25 = arith.constant 0 : index
      %19 = vector.load %arg9[%c0_23, %c0_24, %c0_25] : memref<2x32x128xf32, #tpu.memory_space<vmem>>, vector<2x32x128xf32>
      tpu.vector_store %arg9[%c0_23, %c0_24, %c0_25], %18 {strides = array<i32>} : memref<2x32x128xf32, #tpu.memory_space<vmem>>, vector<2x32x128xf32>,
    } else {
    }
    %c0 = arith.constant 0 : index
    %c0_1 = arith.constant 0 : index
    %c0_2 = arith.constant 0 : index
    %3 = vector.load %arg8[%c0, %c0_1, %c0_2] : memref<2x32x128xf32, #tpu.memory_space<vmem>>, vector<2x32x128xf32>
    %c0_3 = arith.constant 0 : index
    %c0_4 = arith.constant 0 : index
    %c0_5 = arith.constant 0 : index
    %4 = vector.load %arg9[%c0_3, %c0_4, %c0_5] : memref<2x32x128xf32, #tpu.memory_space<vmem>>, vector<2x32x128xf32>
    %c0_6 = arith.constant 0 : index
    %c0_7 = arith.constant 0 : index
    %c0_8 = arith.constant 0 : index
    %5 = vector.load %arg2[%c0_6, %c0_7, %c0_8] : memref<2x32x256xf32, #tpu.memory_space<vmem>>, vector<2x32x128xf32>
    %6 = arith.addf %3, %5 : vector<2x32x128xf32>
    %7 = arith.maximumf %4, %5 : vector<2x32x128xf32>
    %c0_9 = arith.constant 0 : index
    %c0_10 = arith.constant 0 : index
    %c128 = arith.constant 128 : index
    %8 = vector.load %arg2[%c0_9, %c0_10, %c128] : memref<2x32x256xf32, #tpu.memory_space<vmem>>, vector<2x32x128xf32>
    %9 = arith.addf %6, %8 : vector<2x32x128xf32>
    %10 = arith.maximumf %7, %8 : vector<2x32x128xf32>
    %c0_11 = arith.constant 0 : index
    %c0_12 = arith.constant 0 : index
    %c0_13 = arith.constant 0 : index
    %11 = vector.load %arg8[%c0_11, %c0_12, %c0_13] : memref<2x32x128xf32, #tpu.memory_space<vmem>>, vector<2x32x128xf32>
    tpu.vector_store %arg8[%c0_11, %c0_12, %c0_13], %9 {strides = array<i32>} : memref<2x32x128xf32, #tpu.memory_space<vmem>>, vector<2x32x128xf32>,
    %c0_14 = arith.constant 0 : index
    %c0_15 = arith.constant 0 : index
    %c0_16 = arith.constant 0 : index
    %12 = vector.load %arg9[%c0_14, %c0_15, %c0_16] : memref<2x32x128xf32, #tpu.memory_space<vmem>>, vector<2x32x128xf32>
    tpu.vector_store %arg9[%c0_14, %c0_15, %c0_16], %10 {strides = array<i32>} : memref<2x32x128xf32, #tpu.memory_space<vmem>>, vector<2x32x128xf32>,
    %c0_i32_17 = arith.constant 0 : i32
    %13 = arith.cmpi eq, %arg1, %c0_i32_17 : i32
    %14 = arith.extui %13 : i1 to i32
    %c0_i32_18 = arith.constant 0 : i32
    %15 = arith.cmpi ne, %14, %c0_i32_18 : i32
    scf.if %15 {
      %c0_19 = arith.constant 0 : index
      %c0_20 = arith.constant 0 : index
      %16 = vector.load %arg3[%c0_19, %c0_20] : memref<2x32xf32, #tpu.memory_space<vmem>>, vector<2x32xf32>
      %c0_21 = arith.constant 0 : index
      %c0_22 = arith.constant 0 : index
      %17 = vector.load %arg4[%c0_21, %c0_22] : memref<2x1xf32, #tpu.memory_space<vmem>>, vector<2x1xf32>
      %c0_23 = arith.constant 0 : index
      %c0_24 = arith.constant 0 : index
      %18 = vector.load %arg5[%c0_23, %c0_24] : memref<32x2xf32, #tpu.memory_space<vmem>>, vector<32x2xf32>
      %c0_25 = arith.constant 0 : index
      %c0_26 = arith.constant 0 : index
      %19 = vector.load %arg6[%c0_25, %c0_26] : memref<32x1xf32, #tpu.memory_space<vmem>>, vector<32x1xf32>
      %c0_27 = arith.constant 0 : index
      %c0_28 = arith.constant 0 : index
      %c0_29 = arith.constant 0 : index
      %20 = vector.load %arg8[%c0_27, %c0_28, %c0_29] : memref<2x32x128xf32, #tpu.memory_space<vmem>>, vector<1x32x128xf32>
      %21 = vector.shape_cast %20 : vector<1x32x128xf32> to vector<32x128xf32>
      %cst = arith.constant dense<0.000000e+00> : vector<32xf32>
      %22 = vector.multi_reduction <add>, %21, %cst [1] : vector<32x128xf32> to vector<32xf32>
      %23 = vector.shape_cast %22 : vector<32xf32> to vector<32x1xf32>
      %cst_30 = arith.constant 3.906250e-03 : f32
      %24 = vector.broadcast %cst_30 : f32 to vector<32x1xf32>
      %25 = arith.mulf %23, %24 : vector<32x1xf32>
      %c0_31 = arith.constant 0 : index
      %c0_32 = arith.constant 0 : index
      %c0_33 = arith.constant 0 : index
      %26 = vector.load %arg9[%c0_31, %c0_32, %c0_33] : memref<2x32x128xf32, #tpu.memory_space<vmem>>, vector<1x32x128xf32>
      %27 = vector.shape_cast %26 : vector<1x32x128xf32> to vector<32x128xf32>
      %cst_34 = arith.constant dense<0xFF800000> : vector<32xf32>
      %28 = vector.multi_reduction <maximumf>, %27, %cst_34 [1] : vector<32x128xf32> to vector<32xf32>
      %29 = vector.shape_cast %28 : vector<32xf32> to vector<32x1xf32>
      %30 = tpu.concatenate %25, %29 in 1 : vector<32x1xf32>, vector<32x1xf32> -> vector<32x2xf32>
      %cst_35 = arith.constant dense<0.000000e+00> : vector<2x2xf32>
      %31 = tpu.matmul %16, %30, %cst_35 {dimension_numbers = #tpu.dot_dimension_numbers<[1], [0], [0], [1], [0, 0, 1, 1], [], []>} : vector<2x32xf32>, vector<32x2xf32>, vector<2x2xf32> -> vector<2x2xf32>
      %32 = vector.broadcast %17 : vector<2x1xf32> to vector<2x2xf32>
      %33 = arith.addf %31, %32 : vector<2x2xf32>
      %cst_36 = arith.constant 0.000000e+00 : f32
      %34 = vector.broadcast %cst_36 : f32 to vector<2x2xf32>
      %35 = arith.maximumf %33, %34 : vector<2x2xf32>
      %cst_37 = arith.constant dense<0.000000e+00> : vector<32x2xf32>
      %36 = tpu.matmul %18, %35, %cst_37 {dimension_numbers = #tpu.dot_dimension_numbers<[1], [0], [0], [1], [0, 0, 1, 1], [], []>} : vector<32x2xf32>, vector<2x2xf32>, vector<32x2xf32> -> vector<32x2xf32>
      %37 = vector.broadcast %19 : vector<32x1xf32> to vector<32x2xf32>
      %38 = arith.addf %36, %37 : vector<32x2xf32>
      %39 = arith.negf %38 : vector<32x2xf32>
      %40 = math.exp %39 : vector<32x2xf32>
      %cst_38 = arith.constant 1.000000e+00 : f32
      %41 = vector.broadcast %cst_38 : f32 to vector<32x2xf32>
      %42 = arith.addf %41, %40 : vector<32x2xf32>
      %43 = arith.divf %41, %42 : vector<32x2xf32>
      %44 = vector.extract_strided_slice %43 {offsets = [0, 0], sizes = [32, 1], strides = [1, 1]} : vector<32x2xf32> to vector<32x1xf32>
      %45 = vector.extract_strided_slice %43 {offsets = [0, 1], sizes = [32, 1], strides = [1, 1]} : vector<32x2xf32> to vector<32x1xf32>
      %46 = arith.addf %44, %45 : vector<32x1xf32>
      %c0_39 = arith.constant 0 : index
      %c0_40 = arith.constant 0 : index
      %c0_41 = arith.constant 0 : index
      %47 = vector.load %arg7[%c0_39, %c0_40, %c0_41] : memref<2x32x1xf32, #tpu.memory_space<vmem>>, vector<1x32x1xf32>
      %48 = vector.shape_cast %47 : vector<1x32x1xf32> to vector<32x1xf32>
      %49 = vector.shape_cast %46 : vector<32x1xf32> to vector<1x32x1xf32>
      tpu.vector_store %arg7[%c0_39, %c0_40, %c0_41], %49 {strides = array<i32>} : memref<2x32x1xf32, #tpu.memory_space<vmem>>, vector<1x32x1xf32>,
      %c1 = arith.constant 1 : index
      %c0_42 = arith.constant 0 : index
      %c0_43 = arith.constant 0 : index
      %50 = vector.load %arg8[%c1, %c0_42, %c0_43] : memref<2x32x128xf32, #tpu.memory_space<vmem>>, vector<1x32x128xf32>
      %51 = vector.shape_cast %50 : vector<1x32x128xf32> to vector<32x128xf32>
      %cst_44 = arith.constant dense<0.000000e+00> : vector<32xf32>
      %52 = vector.multi_reduction <add>, %51, %cst_44 [1] : vector<32x128xf32> to vector<32xf32>
      %53 = vector.shape_cast %52 : vector<32xf32> to vector<32x1xf32>
      %cst_45 = arith.constant 3.906250e-03 : f32
      %54 = vector.broadcast %cst_45 : f32 to vector<32x1xf32>
      %55 = arith.mulf %53, %54 : vector<32x1xf32>
      %c1_46 = arith.constant 1 : index
      %c0_47 = arith.constant 0 : index
      %c0_48 = arith.constant 0 : index
      %56 = vector.load %arg9[%c1_46, %c0_47, %c0_48] : memref<2x32x128xf32, #tpu.memory_space<vmem>>, vector<1x32x128xf32>
      %57 = vector.shape_cast %56 : vector<1x32x128xf32> to vector<32x128xf32>
      %cst_49 = arith.constant dense<0xFF800000> : vector<32xf32>
      %58 = vector.multi_reduction <maximumf>, %57, %cst_49 [1] : vector<32x128xf32> to vector<32xf32>
      %59 = vector.shape_cast %58 : vector<32xf32> to vector<32x1xf32>
      %60 = tpu.concatenate %55, %59 in 1 : vector<32x1xf32>, vector<32x1xf32> -> vector<32x2xf32>
      %cst_50 = arith.constant dense<0.000000e+00> : vector<2x2xf32>
      %61 = tpu.matmul %16, %60, %cst_50 {dimension_numbers = #tpu.dot_dimension_numbers<[1], [0], [0], [1], [0, 0, 1, 1], [], []>} : vector<2x32xf32>, vector<32x2xf32>, vector<2x2xf32> -> vector<2x2xf32>
      %62 = vector.broadcast %17 : vector<2x1xf32> to vector<2x2xf32>
      %63 = arith.addf %61, %62 : vector<2x2xf32>
      %cst_51 = arith.constant 0.000000e+00 : f32
      %64 = vector.broadcast %cst_51 : f32 to vector<2x2xf32>
      %65 = arith.maximumf %63, %64 : vector<2x2xf32>
      %cst_52 = arith.constant dense<0.000000e+00> : vector<32x2xf32>
      %66 = tpu.matmul %18, %65, %cst_52 {dimension_numbers = #tpu.dot_dimension_numbers<[1], [0], [0], [1], [0, 0, 1, 1], [], []>} : vector<32x2xf32>, vector<2x2xf32>, vector<32x2xf32> -> vector<32x2xf32>
      %67 = vector.broadcast %19 : vector<32x1xf32> to vector<32x2xf32>
      %68 = arith.addf %66, %67 : vector<32x2xf32>
      %69 = arith.negf %68 : vector<32x2xf32>
      %70 = math.exp %69 : vector<32x2xf32>
      %cst_53 = arith.constant 1.000000e+00 : f32
      %71 = vector.broadcast %cst_53 : f32 to vector<32x2xf32>
      %72 = arith.addf %71, %70 : vector<32x2xf32>
      %73 = arith.divf %71, %72 : vector<32x2xf32>
      %74 = vector.extract_strided_slice %73 {offsets = [0, 0], sizes = [32, 1], strides = [1, 1]} : vector<32x2xf32> to vector<32x1xf32>
      %75 = vector.extract_strided_slice %73 {offsets = [0, 1], sizes = [32, 1], strides = [1, 1]} : vector<32x2xf32> to vector<32x1xf32>
      %76 = arith.addf %74, %75 : vector<32x1xf32>
      %c1_54 = arith.constant 1 : index
      %c0_55 = arith.constant 0 : index
      %c0_56 = arith.constant 0 : index
      %77 = vector.load %arg7[%c1_54, %c0_55, %c0_56] : memref<2x32x1xf32, #tpu.memory_space<vmem>>, vector<1x32x1xf32>
      %78 = vector.shape_cast %77 : vector<1x32x1xf32> to vector<32x1xf32>
      %79 = vector.shape_cast %76 : vector<32x1xf32> to vector<1x32x1xf32>
      tpu.vector_store %arg7[%c1_54, %c0_55, %c0_56], %79 {strides = array<i32>} : memref<2x32x1xf32, #tpu.memory_space<vmem>>, vector<1x32x1xf32>,
    } else {
    }
    return
  }
  func.func @transform_0(%arg0: i32, %arg1: i32) -> (i32, i32, i32) {
    %c0_i32 = arith.constant 0 : i32
    %c0_i32_0 = arith.constant 0 : i32
    return %arg0, %c0_i32, %arg1 : i32, i32, i32
  }
  func.func @transform_1(%arg0: i32, %arg1: i32) -> (i32, i32) {
    %c0_i32 = arith.constant 0 : i32
    %c0_i32_0 = arith.constant 0 : i32
    %c0_i32_1 = arith.constant 0 : i32
    return %c0_i32, %c0_i32_0 : i32, i32
  }
  func.func @transform_2(%arg0: i32, %arg1: i32) -> (i32, i32) {
    %c0_i32 = arith.constant 0 : i32
    %c0_i32_0 = arith.constant 0 : i32
    %c0_i32_1 = arith.constant 0 : i32
    return %c0_i32, %c0_i32_0 : i32, i32
  }
  func.func @transform_3(%arg0: i32, %arg1: i32) -> (i32, i32) {
    %c0_i32 = arith.constant 0 : i32
    %c0_i32_0 = arith.constant 0 : i32
    %c0_i32_1 = arith.constant 0 : i32
    return %c0_i32, %c0_i32_0 : i32, i32
  }
  func.func @transform_4(%arg0: i32, %arg1: i32) -> (i32, i32) {
    %c0_i32 = arith.constant 0 : i32
    %c0_i32_0 = arith.constant 0 : i32
    %c0_i32_1 = arith.constant 0 : i32
    return %c0_i32, %c0_i32_0 : i32, i32
  }
  func.func @transform_5(%arg0: i32, %arg1: i32) -> (i32, i32, i32) {
    %c0_i32 = arith.constant 0 : i32
    %c0_i32_0 = arith.constant 0 : i32
    %c0_i32_1 = arith.constant 0 : i32
    return %arg0, %c0_i32, %c0_i32_0 : i32, i32, i32
  }
}

</mosaic_0001>

<llo_original>
// kernel: tpu_custom_call.1
$region0: #{tpu_custom_call.1}
  #allocation0 [shape = 'u32[]', space=smem, size = 0x4, offset = 0x4, fixed_abs, tag = 'smem constant byte address 0x4 - core index']
  #allocation1 [shape = 'u32[144,128]{1,0:T(1,128)}', space=vmem, size = 0x12000, scoped, tag = 'internal scratch']
  #allocation2 [shape = 'f32[2,32,128]{2,1,0:T(8,128)}', space=vmem, size = 0x8000, scoped, tag = 'scratch operand']
  #allocation3 [shape = 'f32[2,32,128]{2,1,0:T(8,128)}', space=vmem, size = 0x8000, scoped, tag = 'scratch operand']
  %s0 = inlined_call_operand.hbm [shape: f32[2,32,256], index: 0, kind: input, shape index: {}]
  %s1 = inlined_call_operand.vmem [shape: f32[2,32], index: 1, kind: input, shape index: {}]
  %s2 = inlined_call_operand.vmem [shape: f32[2,1], index: 2, kind: input, shape index: {}]
  %s3 = inlined_call_operand.vmem [shape: f32[32,2], index: 3, kind: input, shape index: {}]
  %s4 = inlined_call_operand.vmem [shape: f32[32,1], index: 4, kind: input, shape index: {}]
  %s5 = inlined_call_operand.vmem [shape: f32[2,32,1], index: 5, kind: output, shape index: {}]
  %s6 = sld [smem:[#allocation0]]
  $region42: #{tpu_custom_call.1} parent=0
    _
  %s8 = ssub.s32 1, %s6
  %s9 = scalar_select 0, %s8, %s6
  $region1: #{tpu_custom_call.1} parent=0
    #allocation4 [shape = 'u8[65536]{0}', space=vmem, size = 0x10000, scoped, tag = 'input window, operand 0, single buffered']
    #allocation5 [shape = 's32[1]{0}', space=sflag, size = 0x4, scoped, tag = 'scoped memory for tpu_custom_call.1']
    %10 = vsyncpa [#allocation5], 0
    // Predicated region
    $region2: #{tpu_custom_call.1} parent=1 // pred_check
      _
    $region3: #{tpu_custom_call.1} parent=1 // pred_check_branch
      %12 = sbr.rel (0) target = $region5
    $region4: #{tpu_custom_call.1} parent=1 // pred_region
      %s14 = ssub.s32 2048, 2048
      %15 = vsyncadd [#allocation5], %s14
      %s16 = sshll.u32 [#allocation4], 4
      %s17 = int_to_ptr.vmem [resolvable:$true] %s16
      %22 = dma.hbm_to_vmem [thread:$0]  %s0, 2048, %s17, [#allocation5], 256, 256, 16
    $region5: #{tpu_custom_call.1} parent=1 // pred_fallthru
      _
    // Predicated region
    $region6: #{tpu_custom_call.1} parent=1 // pred_check
      _
    $region7: #{tpu_custom_call.1} parent=1 // pred_check_branch
      %24 = sbr.rel (0) target = $region9
    $region8: #{tpu_custom_call.1} parent=1 // pred_region
      _
    $region9: #{tpu_custom_call.1} parent=1 // pred_fallthru
      _
    // Predicated region
    $region10: #{tpu_custom_call.1} parent=1 // pred_check
      _
    $region11: #{tpu_custom_call.1} parent=1 // pred_check_branch
      %26 = sbr.rel (0) target = $region13
    $region12: #{tpu_custom_call.1} parent=1 // pred_region
      _
    $region13: #{tpu_custom_call.1} parent=1 // pred_fallthru
      _
    // Predicated region
    $region14: #{tpu_custom_call.1} parent=1 // pred_check
      _
    $region15: #{tpu_custom_call.1} parent=1 // pred_check_branch
      %28 = sbr.rel (0) target = $region17
    $region16: #{tpu_custom_call.1} parent=1 // pred_region
      _
    $region17: #{tpu_custom_call.1} parent=1 // pred_fallthru
      _
    // Predicated region
    $region18: #{tpu_custom_call.1} parent=1 // pred_check
      _
    $region19: #{tpu_custom_call.1} parent=1 // pred_check_branch
      %30 = sbr.rel (0) target = $region21
    $region20: #{tpu_custom_call.1} parent=1 // pred_region
      _
    $region21: #{tpu_custom_call.1} parent=1 // pred_fallthru
      _
    // Predicated region
    $region22: #{tpu_custom_call.1} parent=1 // pred_check
      _
    $region23: #{tpu_custom_call.1} parent=1 // pred_check_branch
      %32 = sbr.rel (0) target = $region25
    $region24: #{tpu_custom_call.1} parent=1 // pred_region
      %33 = dma.done [#allocation5], 2048
    $region25: #{tpu_custom_call.1} parent=1 // pred_fallthru
      _
    %p34 = scmp.eq.s32.totalorder 0, 0
    // Predicated region
    $region26: #{tpu_custom_call.1} parent=1 // pred_check
      %p35 = pneg %p34
    $region27: #{tpu_custom_call.1} parent=1 // pred_check_branch
      %37 = sbr.rel (%p35) target = $region29
    $region28: #{tpu_custom_call.1} parent=1 // pred_region
      %38 = vst [vmem:[#allocation2] sm:$0xff] 0.0
      %39 = vst [vmem:[#allocation2 + $0x8] sm:$0xff] 0.0
      %40 = vst [vmem:[#allocation2 + $0x10] sm:$0xff] 0.0
      %41 = vst [vmem:[#allocation2 + $0x18] sm:$0xff] 0.0
      %42 = vst [vmem:[#allocation2 + $0x20] sm:$0xff] 0.0
      %43 = vst [vmem:[#allocation2 + $0x28] sm:$0xff] 0.0
      %44 = vst [vmem:[#allocation2 + $0x30] sm:$0xff] 0.0
      %45 = vst [vmem:[#allocation2 + $0x38] sm:$0xff] 0.0
      %46 = vst [vmem:[#allocation3] sm:$0xff] -inf
      %47 = vst [vmem:[#allocation3 + $0x8] sm:$0xff] -inf
      %48 = vst [vmem:[#allocation3 + $0x10] sm:$0xff] -inf
      %49 = vst [vmem:[#allocation3 + $0x18] sm:$0xff] -inf
      %50 = vst [vmem:[#allocation3 + $0x20] sm:$0xff] -inf
      %51 = vst [vmem:[#allocation3 + $0x28] sm:$0xff] -inf
      %52 = vst [vmem:[#allocation3 + $0x30] sm:$0xff] -inf
      %53 = vst [vmem:[#allocation3 + $0x38] sm:$0xff] -inf
    $region29: #{tpu_custom_call.1} parent=1 // pred_fallthru
      _
    %v54 = vld [vmem:[#allocation2] sm:$0xff]
    %v55 = vld [vmem:[#allocation2 + $0x8] sm:$0xff]
    %v56 = vld [vmem:[#allocation2 + $0x10] sm:$0xff]
    %v57 = vld [vmem:[#allocation2 + $0x18] sm:$0xff]
    %v58 = vld [vmem:[#allocation2 + $0x20] sm:$0xff]
    %v59 = vld [vmem:[#allocation2 + $0x28] sm:$0xff]
    %v60 = vld [vmem:[#allocation2 + $0x30] sm:$0xff]
    %v61 = vld [vmem:[#allocation2 + $0x38] sm:$0xff]
    %v62 = vld [vmem:[#allocation3] sm:$0xff]
    %v63 = vld [vmem:[#allocation3 + $0x8] sm:$0xff]
    %v64 = vld [vmem:[#allocation3 + $0x10] sm:$0xff]
    %v65 = vld [vmem:[#allocation3 + $0x18] sm:$0xff]
    %v66 = vld [vmem:[#allocation3 + $0x20] sm:$0xff]
    %v67 = vld [vmem:[#allocation3 + $0x28] sm:$0xff]
    %v68 = vld [vmem:[#allocation3 + $0x30] sm:$0xff]
    %v69 = vld [vmem:[#allocation3 + $0x38] sm:$0xff]
    %v70 = vld [vmem:[#allocation4] sm:$0xff]
    %v71 = vld [vmem:[#allocation4 + $0x10] sm:$0xff]
    %v72 = vld [vmem:[#allocation4 + $0x20] sm:$0xff]
    %v73 = vld [vmem:[#allocation4 + $0x30] sm:$0xff]
    %v74 = vld [vmem:[#allocation4 + $0x40] sm:$0xff]
    %v75 = vld [vmem:[#allocation4 + $0x50] sm:$0xff]
    %v76 = vld [vmem:[#allocation4 + $0x60] sm:$0xff]
    %v77 = vld [vmem:[#allocation4 + $0x70] sm:$0xff]
    %v78 = vadd.f32 %v54, %v70
    %v79 = vadd.f32 %v55, %v71
    %v80 = vadd.f32 %v56, %v72
    %v81 = vadd.f32 %v57, %v73
    %v82 = vadd.f32 %v58, %v74
    %v83 = vadd.f32 %v59, %v75
    %v84 = vadd.f32 %v60, %v76
    %v85 = vadd.f32 %v61, %v77
    %v86 = vmax.f32 %v62, %v70
    %v87 = vmax.f32 %v63, %v71
    %v88 = vmax.f32 %v64, %v72
    %v89 = vmax.f32 %v65, %v73
    %v90 = vmax.f32 %v66, %v74
    %v91 = vmax.f32 %v67, %v75
    %v92 = vmax.f32 %v68, %v76
    %v93 = vmax.f32 %v69, %v77
    %v94 = vld [vmem:[#allocation4 + $0x8] sm:$0xff]
    %v95 = vld [vmem:[#allocation4 + $0x18] sm:$0xff]
    %v96 = vld [vmem:[#allocation4 + $0x28] sm:$0xff]
    %v97 = vld [vmem:[#allocation4 + $0x38] sm:$0xff]
    %v98 = vld [vmem:[#allocation4 + $0x48] sm:$0xff]
    %v99 = vld [vmem:[#allocation4 + $0x58] sm:$0xff]
    %v100 = vld [vmem:[#allocation4 + $0x68] sm:$0xff]
    %v101 = vld [vmem:[#allocation4 + $0x78] sm:$0xff]
    %v102 = vadd.f32 %v78, %v94
    %v103 = vadd.f32 %v79, %v95
    %v104 = vadd.f32 %v80, %v96
    %v105 = vadd.f32 %v81, %v97
    %v106 = vadd.f32 %v82, %v98
    %v107 = vadd.f32 %v83, %v99
    %v108 = vadd.f32 %v84, %v100
    %v109 = vadd.f32 %v85, %v101
    %v110 = vmax.f32 %v86, %v94
    %v111 = vmax.f32 %v87, %v95
    %v112 = vmax.f32 %v88, %v96
    %v113 = vmax.f32 %v89, %v97
    %v114 = vmax.f32 %v90, %v98
    %v115 = vmax.f32 %v91, %v99
    %v116 = vmax.f32 %v92, %v100
    %v117 = vmax.f32 %v93, %v101
    %118 = vst [vmem:[#allocation2] sm:$0xff] %v102
    %119 = vst [vmem:[#allocation2 + $0x8] sm:$0xff] %v103
    %120 = vst [vmem:[#allocation2 + $0x10] sm:$0xff] %v104
    %121 = vst [vmem:[#allocation2 + $0x18] sm:$0xff] %v105
    %122 = vst [vmem:[#allocation2 + $0x20] sm:$0xff] %v106
    %123 = vst [vmem:[#allocation2 + $0x28] sm:$0xff] %v107
    %124 = vst [vmem:[#allocation2 + $0x30] sm:$0xff] %v108
    %125 = vst [vmem:[#allocation2 + $0x38] sm:$0xff] %v109
    %126 = vst [vmem:[#allocation3] sm:$0xff] %v110
    %127 = vst [vmem:[#allocation3 + $0x8] sm:$0xff] %v111
    %128 = vst [vmem:[#allocation3 + $0x10] sm:$0xff] %v112
    %129 = vst [vmem:[#allocation3 + $0x18] sm:$0xff] %v113
    %130 = vst [vmem:[#allocation3 + $0x20] sm:$0xff] %v114
    %131 = vst [vmem:[#allocation3 + $0x28] sm:$0xff] %v115
    %132 = vst [vmem:[#allocation3 + $0x30] sm:$0xff] %v116
    %133 = vst [vmem:[#allocation3 + $0x38] sm:$0xff] %v117
    // Predicated region
    $region30: #{tpu_custom_call.1} parent=1 // pred_check
      %p134 = pneg %p34
    $region31: #{tpu_custom_call.1} parent=1 // pred_check_branch
      %136 = sbr.rel (%p134) target = $region33
    $region32: #{tpu_custom_call.1} parent=1 // pred_region
      %v137 = vld [vmem:[%s1] sm:$0x3]
      %v138 = vld [vmem:[%s2] sm:$0x3]
      %v139 = vld [vmem:[%s3] sm:$0xff]
      %v140 = vld [vmem:[%s3 + $0x8] sm:$0xff]
      %v141 = vld [vmem:[%s3 + $0x10] sm:$0xff]
      %v142 = vld [vmem:[%s3 + $0x18] sm:$0xff]
      %v143 = vld [vmem:[%s4] sm:$0xff]
      %v144 = vld [vmem:[%s4 + $0x8] sm:$0xff]
      %v145 = vld [vmem:[%s4 + $0x10] sm:$0xff]
      %v146 = vld [vmem:[%s4 + $0x18] sm:$0xff]
      %v147 = vld [vmem:[#allocation2] sm:$0xff]
      %v148 = vld [vmem:[#allocation2 + $0x8] sm:$0xff]
      %v149 = vld [vmem:[#allocation2 + $0x10] sm:$0xff]
      %v150 = vld [vmem:[#allocation2 + $0x18] sm:$0xff]
      %151 = vadd.xlane.f32.xlu0 %v147
      %v152 = vpop.xlane.xlu0 %151
      %153 = vadd.xlane.f32.xlu0 %v148
      %v154 = vpop.xlane.xlu0 %153
      %155 = vadd.xlane.f32.xlu0 %v149
      %v156 = vpop.xlane.xlu0 %155
      %157 = vadd.xlane.f32.xlu0 %v150
      %v158 = vpop.xlane.xlu0 %157
      %v159 = vmul.f32 %v152, 0.00390625
      %v160 = vmul.f32 %v154, 0.00390625
      %v161 = vmul.f32 %v156, 0.00390625
      %v162 = vmul.f32 %v158, 0.00390625
      %v163 = vld [vmem:[#allocation3] sm:$0xff]
      %v164 = vld [vmem:[#allocation3 + $0x8] sm:$0xff]
      %v165 = vld [vmem:[#allocation3 + $0x10] sm:$0xff]
      %v166 = vld [vmem:[#allocation3 + $0x18] sm:$0xff]
      %167 = vmax.xlane.f32.xlu0 %v163
      %v168 = vpop.xlane.xlu0 %167
      %169 = vmax.xlane.f32.xlu0 %v164
      %v170 = vpop.xlane.xlu0 %169
      %171 = vmax.xlane.f32.xlu0 %v165
      %v172 = vpop.xlane.xlu0 %171
      %173 = vmax.xlane.f32.xlu0 %v166
      %v174 = vpop.xlane.xlu0 %173
      %vm175 = vcmask 7168
      %v176 = vsel %vm175, %v159, %v168
      %v177 = vsel %vm175, %v160, %v170
      %v178 = vsel %vm175, %v161, %v172
      %v179 = vsel %vm175, %v162, %v174
      %181 = vset.pattern.permute.xlu0 0
      %182 = vperm.xlu0 %181, %v138
      %v183 = vpop.permute.xlu0 %182
      %vm185 = vcmask 261120
      %v187 = vsel %vm185, %v137, 0
      %189 = vmatprep.subr.mxu0 0.0
      %190 = vmatpush1.msra.mxu0 %v176
      %191 = vmatprep.subr.mxu0 0.0
      %192 = vmatpush1.msra.mxu0 %v177
      %193 = vmatprep.subr.mxu0 0.0
      %194 = vmatpush1.msra.mxu0 %v178
      %195 = vmatprep.subr.mxu0 0.0
      %196 = vmatpush1.msra.mxu0 %v179
      %197 = vmatprep.subr.mxu0 0.0
      %198 = vmatpush1.msra.mxu0 0.0
      %199 = vmatprep.subr.mxu0 0.0
      %200 = vmatpush1.msra.mxu0 0.0
      %201 = vmatprep.subr.mxu0 0.0
      %202 = vmatpush1.msra.mxu0 0.0
      %203 = vmatprep.subr.mxu0 0.0
      %204 = vmatpush1.msra.mxu0 0.0
      %205 = vmatprep.subr.mxu0 0.0
      %206 = vmatpush1.msra.mxu0 0.0
      %207 = vmatprep.subr.mxu0 0.0
      %208 = vmatpush1.msra.mxu0 0.0
      %209 = vmatprep.subr.mxu0 0.0
      %210 = vmatpush1.msra.mxu0 0.0
      %211 = vmatprep.subr.mxu0 0.0
      %212 = vmatpush1.msra.mxu0 0.0
      %213 = vmatprep.subr.mxu0 0.0
      %214 = vmatpush1.msra.mxu0 0.0
      %215 = vmatprep.subr.mxu0 0.0
      %216 = vmatpush1.msra.mxu0 0.0
      %217 = vmatprep.subr.mxu0 0.0
      %218 = vmatpush1.msra.mxu0 0.0
      %219 = vmatprep.subr.mxu0 0.0
      %220 = vmatpush1.msra.mxu0 0.0
      %221 = vmatprep.subr.mxu0 0.0
      %222 = vmatpush1.msra.mxu0 0.0
      %223 = vmatprep.subr.mxu0 0.0
      %224 = vmatpush1.msra.mxu0 0.0
      %225 = vmatprep.subr.mxu0 0.0
      %226 = vmatpush1.msra.mxu0 0.0
      %227 = vmatprep.subr.mxu0 0.0
      %228 = vmatpush1.msra.mxu0 0.0
      %229 = vmatprep.subr.mxu0 0.0
      %230 = vmatpush1.msra.mxu0 0.0
      %231 = vmatprep.subr.mxu0 0.0
      %232 = vmatpush1.msra.mxu0 0.0
      %233 = vmatprep.subr.mxu0 0.0
      %234 = vmatpush1.msra.mxu0 0.0
      %235 = vmatprep.subr.mxu0 0.0
      %236 = vmatpush1.msra.mxu0 0.0
      %237 = vmatprep.subr.mxu0 0.0
      %238 = vmatpush1.msra.mxu0 0.0
      %239 = vmatprep.subr.mxu0 0.0
      %240 = vmatpush1.msra.mxu0 0.0
      %241 = vmatprep.subr.mxu0 0.0
      %242 = vmatpush1.msra.mxu0 0.0
      %243 = vmatprep.subr.mxu0 0.0
      %244 = vmatpush1.msra.mxu0 0.0
      %245 = vmatprep.subr.mxu0 0.0
      %246 = vmatpush1.msra.mxu0 0.0
      %247 = vmatprep.subr.mxu0 0.0
      %248 = vmatpush1.msra.mxu0 0.0
      %249 = vmatprep.subr.mxu0 0.0
      %250 = vmatpush1.msra.mxu0 0.0
      %251 = vmatprep.subr.mxu0 0.0
      %252 = vmatpush1.msra.mxu0 0.0
      %253 = vmatprep.mubr.f32.mxu0 0.0
      %254 = vmatmul.mubr.f32.gmra.mrb[0].mxu0 %v187
      %v255 = vpop.f32.mrb[0].mxu0
      %v256 = vadd.f32 %v183, %v255
      %v257 = vpop.f32.mrb[0].mxu0
      %258 = vdwg.mxu0
      %v259 = vmax.f32 %v256, 0.0
      %261 = vset.pattern.permute.xlu0 0
      %262 = vperm.xlu0 %261, %v143
      %v263 = vpop.permute.xlu0 %262
      %266 = vset.pattern.permute.xlu0 0
      %267 = vperm.xlu0 %266, %v144
      %v268 = vpop.permute.xlu0 %267
      %271 = vset.pattern.permute.xlu0 0
      %272 = vperm.xlu0 %271, %v145
      %v273 = vpop.permute.xlu0 %272
      %276 = vset.pattern.permute.xlu0 0
      %277 = vperm.xlu0 %276, %v146
      %v278 = vpop.permute.xlu0 %277
      %vm280 = vcmask 15360
      %v282 = vsel %vm280, %v139, 0
      %v285 = vsel %vm280, %v140, 0
      %v288 = vsel %vm280, %v141, 0
      %v291 = vsel %vm280, %v142, 0
      %vm293 = vcmask 1041408
      %v295 = vsel %vm293, %v259, 0
      %297 = vmatprep.subr.mxu0 0.0
      %298 = vmatpush1.msra.mxu0 %v295
      %299 = vmatprep.subr.mxu0 0.0
      %300 = vmatpush1.msra.mxu0 0.0
      %301 = vmatprep.subr.mxu0 0.0
      %302 = vmatpush1.msra.mxu0 0.0
      %303 = vmatprep.subr.mxu0 0.0
      %304 = vmatpush1.msra.mxu0 0.0
      %305 = vmatprep.subr.mxu0 0.0
      %306 = vmatpush1.msra.mxu0 0.0
      %307 = vmatprep.subr.mxu0 0.0
      %308 = vmatpush1.msra.mxu0 0.0
      %309 = vmatprep.subr.mxu0 0.0
      %310 = vmatpush1.msra.mxu0 0.0
      %311 = vmatprep.subr.mxu0 0.0
      %312 = vmatpush1.msra.mxu0 0.0
      %313 = vmatprep.subr.mxu0 0.0
      %314 = vmatpush1.msra.mxu0 0.0
      %315 = vmatprep.subr.mxu0 0.0
      %316 = vmatpush1.msra.mxu0 0.0
      %317 = vmatprep.subr.mxu0 0.0
      %318 = vmatpush1.msra.mxu0 0.0
      %319 = vmatprep.subr.mxu0 0.0
      %320 = vmatpush1.msra.mxu0 0.0
      %321 = vmatprep.subr.mxu0 0.0
      %322 = vmatpush1.msra.mxu0 0.0
      %323 = vmatprep.subr.mxu0 0.0
      %324 = vmatpush1.msra.mxu0 0.0
      %325 = vmatprep.subr.mxu0 0.0
      %326 = vmatpush1.msra.mxu0 0.0
      %327 = vmatprep.subr.mxu0 0.0
      %328 = vmatpush1.msra.mxu0 0.0
      %329 = vmatprep.subr.mxu0 0.0
      %330 = vmatpush1.msra.mxu0 0.0
      %331 = vmatprep.subr.mxu0 0.0
      %332 = vmatpush1.msra.mxu0 0.0
      %333 = vmatprep.subr.mxu0 0.0
      %334 = vmatpush1.msra.mxu0 0.0
      %335 = vmatprep.subr.mxu0 0.0
      %336 = vmatpush1.msra.mxu0 0.0
      %337 = vmatprep.subr.mxu0 0.0
      %338 = vmatpush1.msra.mxu0 0.0
      %339 = vmatprep.subr.mxu0 0.0
      %340 = vmatpush1.msra.mxu0 0.0
      %341 = vmatprep.subr.mxu0 0.0
      %342 = vmatpush1.msra.mxu0 0.0
      %343 = vmatprep.subr.mxu0 0.0
      %344 = vmatpush1.msra.mxu0 0.0
      %345 = vmatprep.subr.mxu0 0.0
      %346 = vmatpush1.msra.mxu0 0.0
      %347 = vmatprep.subr.mxu0 0.0
      %348 = vmatpush1.msra.mxu0 0.0
      %349 = vmatprep.subr.mxu0 0.0
      %350 = vmatpush1.msra.mxu0 0.0
      %351 = vmatprep.subr.mxu0 0.0
      %352 = vmatpush1.msra.mxu0 0.0
      %353 = vmatprep.subr.mxu0 0.0
      %354 = vmatpush1.msra.mxu0 0.0
      %355 = vmatprep.subr.mxu0 0.0
      %356 = vmatpush1.msra.mxu0 0.0
      %357 = vmatprep.subr.mxu0 0.0
      %358 = vmatpush1.msra.mxu0 0.0
      %359 = vmatprep.subr.mxu0 0.0
      %360 = vmatpush1.msra.mxu0 0.0
      %361 = vmatprep.mubr.f32.mxu0 0.0
      %362 = vmatmul.mubr.f32.gmra.mrb[0].mxu0 %v282
      %v363 = vpop.f32.mrb[0].mxu0
      %v364 = vadd.f32 %v263, %v363
      %v365 = vpop.f32.mrb[0].mxu0
      %366 = vmatprep.mubr.f32.mxu0 0.0
      %367 = vmatmul.mubr.f32.gmra.mrb[0].mxu0 %v285
      %v368 = vpop.f32.mrb[0].mxu0
      %v369 = vadd.f32 %v268, %v368
      %v370 = vpop.f32.mrb[0].mxu0
      %371 = vmatprep.mubr.f32.mxu0 0.0
      %372 = vmatmul.mubr.f32.gmra.mrb[0].mxu0 %v288
      %v373 = vpop.f32.mrb[0].mxu0
      %v374 = vadd.f32 %v273, %v373
      %v375 = vpop.f32.mrb[0].mxu0
      %376 = vmatprep.mubr.f32.mxu0 0.0
      %377 = vmatmul.mubr.f32.gmra.mrb[0].mxu0 %v291
      %v378 = vpop.f32.mrb[0].mxu0
      %v379 = vadd.f32 %v278, %v378
      %v380 = vpop.f32.mrb[0].mxu0
      %381 = vdwg.mxu0
      %v382 = vxor.u32 %v364, 2147483648
      %v383 = vxor.u32 %v369, 2147483648
      %v384 = vxor.u32 %v374, 2147483648
      %v385 = vxor.u32 %v379, 2147483648
      %v386 = vmul.f32 %v382, 1.442695
      %v387 = vpow.pop %v386
      %v388 = vmul.f32 %v383, 1.442695
      %v389 = vpow.pop %v388
      %v390 = vmul.f32 %v384, 1.442695
      %v391 = vpow.pop %v390
      %v392 = vmul.f32 %v385, 1.442695
      %v393 = vpow.pop %v392
      %v394 = vadd.f32 %v387, 1.0
      %v395 = vadd.f32 %v389, 1.0
      %v396 = vadd.f32 %v391, 1.0
      %v397 = vadd.f32 %v393, 1.0
      %v398 = vrcp.pop %v394
      %v399 = vmul.f32 1.0, %v398
      %v400 = vrcp.pop %v395
      %v401 = vmul.f32 1.0, %v400
      %v402 = vrcp.pop %v396
      %v403 = vmul.f32 1.0, %v402
      %v404 = vrcp.pop %v397
      %v405 = vmul.f32 1.0, %v404
      %410 = vrot.lane.b32.xlu0 %v399, 127
      %v411 = vpop.permute.xlu0 %410
      %412 = vrot.lane.b32.xlu0 %v401, 127
      %v413 = vpop.permute.xlu0 %412
      %414 = vrot.lane.b32.xlu0 %v403, 127
      %v415 = vpop.permute.xlu0 %414
      %416 = vrot.lane.b32.xlu0 %v405, 127
      %v417 = vpop.permute.xlu0 %416
      %v422 = vadd.f32 %v399, %v411
      %v423 = vadd.f32 %v401, %v413
      %v424 = vadd.f32 %v403, %v415
      %v425 = vadd.f32 %v405, %v417
      %426 = vst.msk [vmem:[%s5] sm:$0xff] %vm175, %v422
      %427 = vst.msk [vmem:[%s5 + $0x8] sm:$0xff] %vm175, %v423
      %428 = vst.msk [vmem:[%s5 + $0x10] sm:$0xff] %vm175, %v424
      %429 = vst.msk [vmem:[%s5 + $0x18] sm:$0xff] %vm175, %v425
      %s430 = scalar_lea.vmem [#allocation2], 32
      %v431 = vld [vmem:[%s430] sm:$0xff]
      %v432 = vld [vmem:[%s430 + $0x8] sm:$0xff]
      %v433 = vld [vmem:[%s430 + $0x10] sm:$0xff]
      %v434 = vld [vmem:[%s430 + $0x18] sm:$0xff]
      %435 = vadd.xlane.f32.xlu0 %v431
      %v436 = vpop.xlane.xlu0 %435
      %437 = vadd.xlane.f32.xlu0 %v432
      %v438 = vpop.xlane.xlu0 %437
      %439 = vadd.xlane.f32.xlu0 %v433
      %v440 = vpop.xlane.xlu0 %439
      %441 = vadd.xlane.f32.xlu0 %v434
      %v442 = vpop.xlane.xlu0 %441
      %v443 = vmul.f32 %v436, 0.00390625
      %v444 = vmul.f32 %v438, 0.00390625
      %v445 = vmul.f32 %v440, 0.00390625
      %v446 = vmul.f32 %v442, 0.00390625
      %s447 = scalar_lea.vmem [#allocation3], 32
      %v448 = vld [vmem:[%s447] sm:$0xff]
      %v449 = vld [vmem:[%s447 + $0x8] sm:$0xff]
      %v450 = vld [vmem:[%s447 + $0x10] sm:$0xff]
      %v451 = vld [vmem:[%s447 + $0x18] sm:$0xff]
      %452 = vmax.xlane.f32.xlu0 %v448
      %v453 = vpop.xlane.xlu0 %452
      %454 = vmax.xlane.f32.xlu0 %v449
      %v455 = vpop.xlane.xlu0 %454
      %456 = vmax.xlane.f32.xlu0 %v450
      %v457 = vpop.xlane.xlu0 %456
      %458 = vmax.xlane.f32.xlu0 %v451
      %v459 = vpop.xlane.xlu0 %458
      %v460 = vsel %vm175, %v443, %v453
      %v461 = vsel %vm175, %v444, %v455
      %v462 = vsel %vm175, %v445, %v457
      %v463 = vsel %vm175, %v446, %v459
      %464 = vmatprep.subr.mxu0 0.0
      %465 = vmatpush1.msra.mxu0 %v460
      %466 = vmatprep.subr.mxu0 0.0
      %467 = vmatpush1.msra.mxu0 %v461
      %468 = vmatprep.subr.mxu0 0.0
      %469 = vmatpush1.msra.mxu0 %v462
      %470 = vmatprep.subr.mxu0 0.0
      %471 = vmatpush1.msra.mxu0 %v463
      %472 = vmatprep.subr.mxu0 0.0
      %473 = vmatpush1.msra.mxu0 0.0
      %474 = vmatprep.subr.mxu0 0.0
      %475 = vmatpush1.msra.mxu0 0.0
      %476 = vmatprep.subr.mxu0 0.0
      %477 = vmatpush1.msra.mxu0 0.0
      %478 = vmatprep.subr.mxu0 0.0
      %479 = vmatpush1.msra.mxu0 0.0
      %480 = vmatprep.subr.mxu0 0.0
      %481 = vmatpush1.msra.mxu0 0.0
      %482 = vmatprep.subr.mxu0 0.0
      %483 = vmatpush1.msra.mxu0 0.0
      %484 = vmatprep.subr.mxu0 0.0
      %485 = vmatpush1.msra.mxu0 0.0
      %486 = vmatprep.subr.mxu0 0.0
      %487 = vmatpush1.msra.mxu0 0.0
      %488 = vmatprep.subr.mxu0 0.0
      %489 = vmatpush1.msra.mxu0 0.0
      %490 = vmatprep.subr.mxu0 0.0
      %491 = vmatpush1.msra.mxu0 0.0
      %492 = vmatprep.subr.mxu0 0.0
      %493 = vmatpush1.msra.mxu0 0.0
      %494 = vmatprep.subr.mxu0 0.0
      %495 = vmatpush1.msra.mxu0 0.0
      %496 = vmatprep.subr.mxu0 0.0
      %497 = vmatpush1.msra.mxu0 0.0
      %498 = vmatprep.subr.mxu0 0.0
      %499 = vmatpush1.msra.mxu0 0.0
      %500 = vmatprep.subr.mxu0 0.0
      %501 = vmatpush1.msra.mxu0 0.0
      %502 = vmatprep.subr.mxu0 0.0
      %503 = vmatpush1.msra.mxu0 0.0
      %504 = vmatprep.subr.mxu0 0.0
      %505 = vmatpush1.msra.mxu0 0.0
      %506 = vmatprep.subr.mxu0 0.0
      %507 = vmatpush1.msra.mxu0 0.0
      %508 = vmatprep.subr.mxu0 0.0
      %509 = vmatpush1.msra.mxu0 0.0
      %510 = vmatprep.subr.mxu0 0.0
      %511 = vmatpush1.msra.mxu0 0.0
      %512 = vmatprep.subr.mxu0 0.0
      %513 = vmatpush1.msra.mxu0 0.0
      %514 = vmatprep.subr.mxu0 0.0
      %515 = vmatpush1.msra.mxu0 0.0
      %516 = vmatprep.subr.mxu0 0.0
      %517 = vmatpush1.msra.mxu0 0.0
      %518 = vmatprep.subr.mxu0 0.0
      %519 = vmatpush1.msra.mxu0 0.0
      %520 = vmatprep.subr.mxu0 0.0
      %521 = vmatpush1.msra.mxu0 0.0
      %522 = vmatprep.subr.mxu0 0.0
      %523 = vmatpush1.msra.mxu0 0.0
      %524 = vmatprep.subr.mxu0 0.0
      %525 = vmatpush1.msra.mxu0 0.0
      %526 = vmatprep.subr.mxu0 0.0
      %527 = vmatpush1.msra.mxu0 0.0
      %528 = vmatprep.mubr.f32.mxu0 0.0
      %529 = vmatmul.mubr.f32.gmra.mrb[0].mxu0 %v187
      %v530 = vpop.f32.mrb[0].mxu0
      %v531 = vadd.f32 %v183, %v530
      %v532 = vpop.f32.mrb[0].mxu0
      %533 = vdwg.mxu0
      %v534 = vmax.f32 %v531, 0.0
      %v536 = vsel %vm293, %v534, 0
      %538 = vmatprep.subr.mxu0 0.0
      %539 = vmatpush1.msra.mxu0 %v536
      %540 = vmatprep.subr.mxu0 0.0
      %541 = vmatpush1.msra.mxu0 0.0
      %542 = vmatprep.subr.mxu0 0.0
      %543 = vmatpush1.msra.mxu0 0.0
      %544 = vmatprep.subr.mxu0 0.0
      %545 = vmatpush1.msra.mxu0 0.0
      %546 = vmatprep.subr.mxu0 0.0
      %547 = vmatpush1.msra.mxu0 0.0
      %548 = vmatprep.subr.mxu0 0.0
      %549 = vmatpush1.msra.mxu0 0.0
      %550 = vmatprep.subr.mxu0 0.0
      %551 = vmatpush1.msra.mxu0 0.0
      %552 = vmatprep.subr.mxu0 0.0
      %553 = vmatpush1.msra.mxu0 0.0
      %554 = vmatprep.subr.mxu0 0.0
      %555 = vmatpush1.msra.mxu0 0.0
      %556 = vmatprep.subr.mxu0 0.0
      %557 = vmatpush1.msra.mxu0 0.0
      %558 = vmatprep.subr.mxu0 0.0
      %559 = vmatpush1.msra.mxu0 0.0
      %560 = vmatprep.subr.mxu0 0.0
      %561 = vmatpush1.msra.mxu0 0.0
      %562 = vmatprep.subr.mxu0 0.0
      %563 = vmatpush1.msra.mxu0 0.0
      %564 = vmatprep.subr.mxu0 0.0
      %565 = vmatpush1.msra.mxu0 0.0
      %566 = vmatprep.subr.mxu0 0.0
      %567 = vmatpush1.msra.mxu0 0.0
      %568 = vmatprep.subr.mxu0 0.0
      %569 = vmatpush1.msra.mxu0 0.0
      %570 = vmatprep.subr.mxu0 0.0
      %571 = vmatpush1.msra.mxu0 0.0
      %572 = vmatprep.subr.mxu0 0.0
      %573 = vmatpush1.msra.mxu0 0.0
      %574 = vmatprep.subr.mxu0 0.0
      %575 = vmatpush1.msra.mxu0 0.0
      %576 = vmatprep.subr.mxu0 0.0
      %577 = vmatpush1.msra.mxu0 0.0
      %578 = vmatprep.subr.mxu0 0.0
      %579 = vmatpush1.msra.mxu0 0.0
      %580 = vmatprep.subr.mxu0 0.0
      %581 = vmatpush1.msra.mxu0 0.0
      %582 = vmatprep.subr.mxu0 0.0
      %583 = vmatpush1.msra.mxu0 0.0
      %584 = vmatprep.subr.mxu0 0.0
      %585 = vmatpush1.msra.mxu0 0.0
      %586 = vmatprep.subr.mxu0 0.0
      %587 = vmatpush1.msra.mxu0 0.0
      %588 = vmatprep.subr.mxu0 0.0
      %589 = vmatpush1.msra.mxu0 0.0
      %590 = vmatprep.subr.mxu0 0.0
      %591 = vmatpush1.msra.mxu0 0.0
      %592 = vmatprep.subr.mxu0 0.0
      %593 = vmatpush1.msra.mxu0 0.0
      %594 = vmatprep.subr.mxu0 0.0
      %595 = vmatpush1.msra.mxu0 0.0
      %596 = vmatprep.subr.mxu0 0.0
      %597 = vmatpush1.msra.mxu0 0.0
      %598 = vmatprep.subr.mxu0 0.0
      %599 = vmatpush1.msra.mxu0 0.0
      %600 = vmatprep.subr.mxu0 0.0
      %601 = vmatpush1.msra.mxu0 0.0
      %602 = vmatprep.mubr.f32.mxu0 0.0
      %603 = vmatmul.mubr.f32.gmra.mrb[0].mxu0 %v282
      %v604 = vpop.f32.mrb[0].mxu0
      %v605 = vadd.f32 %v263, %v604
      %v606 = vpop.f32.mrb[0].mxu0
      %607 = vmatprep.mubr.f32.mxu0 0.0
      %608 = vmatmul.mubr.f32.gmra.mrb[0].mxu0 %v285
      %v609 = vpop.f32.mrb[0].mxu0
      %v610 = vadd.f32 %v268, %v609
      %v611 = vpop.f32.mrb[0].mxu0
      %612 = vmatprep.mubr.f32.mxu0 0.0
      %613 = vmatmul.mubr.f32.gmra.mrb[0].mxu0 %v288
      %v614 = vpop.f32.mrb[0].mxu0
      %v615 = vadd.f32 %v273, %v614
      %v616 = vpop.f32.mrb[0].mxu0
      %617 = vmatprep.mubr.f32.mxu0 0.0
      %618 = vmatmul.mubr.f32.gmra.mrb[0].mxu0 %v291
      %v619 = vpop.f32.mrb[0].mxu0
      %v620 = vadd.f32 %v278, %v619
      %v621 = vpop.f32.mrb[0].mxu0
      %622 = vdwg.mxu0
      %v623 = vxor.u32 %v605, 2147483648
      %v624 = vxor.u32 %v610, 2147483648
      %v625 = vxor.u32 %v615, 2147483648
      %v626 = vxor.u32 %v620, 2147483648
      %v627 = vmul.f32 %v623, 1.442695
      %v628 = vpow.pop %v627
      %v629 = vmul.f32 %v624, 1.442695
      %v630 = vpow.pop %v629
      %v631 = vmul.f32 %v625, 1.442695
      %v632 = vpow.pop %v631
      %v633 = vmul.f32 %v626, 1.442695
      %v634 = vpow.pop %v633
      %v635 = vadd.f32 %v628, 1.0
      %v636 = vadd.f32 %v630, 1.0
      %v637 = vadd.f32 %v632, 1.0
      %v638 = vadd.f32 %v634, 1.0
      %v639 = vrcp.pop %v635
      %v640 = vmul.f32 1.0, %v639
      %v641 = vrcp.pop %v636
      %v642 = vmul.f32 1.0, %v641
      %v643 = vrcp.pop %v637
      %v644 = vmul.f32 1.0, %v643
      %v645 = vrcp.pop %v638
      %v646 = vmul.f32 1.0, %v645
      %651 = vrot.lane.b32.xlu0 %v640, 127
      %v652 = vpop.permute.xlu0 %651
      %653 = vrot.lane.b32.xlu0 %v642, 127
      %v654 = vpop.permute.xlu0 %653
      %655 = vrot.lane.b32.xlu0 %v644, 127
      %v656 = vpop.permute.xlu0 %655
      %657 = vrot.lane.b32.xlu0 %v646, 127
      %v658 = vpop.permute.xlu0 %657
      %v663 = vadd.f32 %v640, %v652
      %v664 = vadd.f32 %v642, %v654
      %v665 = vadd.f32 %v644, %v656
      %v666 = vadd.f32 %v646, %v658
      %s667 = scalar_lea.vmem %s5, 32
      %668 = vst.msk [vmem:[%s667] sm:$0xff] %vm175, %v663
      %669 = vst.msk [vmem:[%s667 + $0x8] sm:$0xff] %vm175, %v664
      %670 = vst.msk [vmem:[%s667 + $0x10] sm:$0xff] %vm175, %v665
      %671 = vst.msk [vmem:[%s667 + $0x18] sm:$0xff] %vm175, %v666
    $region33: #{tpu_custom_call.1} parent=1 // pred_fallthru
      _
    // Predicated region
    $region34: #{tpu_custom_call.1} parent=1 // pred_check
      _
    $region35: #{tpu_custom_call.1} parent=1 // pred_check_branch
      %673 = sbr.rel (0) target = $region37
    $region36: #{tpu_custom_call.1} parent=1 // pred_region
      _
    $region37: #{tpu_custom_call.1} parent=1 // pred_fallthru
      _
    // Predicated region
    $region38: #{tpu_custom_call.1} parent=1 // pred_check
      _
    $region39: #{tpu_custom_call.1} parent=1 // pred_check_branch
      %675 = sbr.rel (0) target = $region41
    $region40: #{tpu_custom_call.1} parent=1 // pred_region
      _
    $region41: #{tpu_custom_call.1} parent=1 // pred_fallthru
      _
    %676 = vsyncpa [#allocation5], 1

</llo_original>
